<compile_context>
chip_gen: v6e
topology: v6e:2x2x1
jax: 0.10.0
libtpu: 0.0.40
codegen_flags: <defaults>
</compile_context>

<pallas_src>
import jax
import jax.numpy as jnp
from jax import lax
from jax.experimental import pallas as pl
from jax.experimental.pallas import tpu as pltpu


def _ssm_scan_chunk_kernel(x_ref, a_ref, c_ref, y_ref, s_ref, states_ref):
    """One (batch-row, time-chunk) grid step.

    x_ref:      (TT, state)   pre-projected inputs  x_t = u_t @ B_d
    a_ref:      (1, state)    discrete diagonal A_d
    c_ref:      (state, out)  output projection
    y_ref:      (TT, out)     output chunk
    s_ref:      (1, state)    carried recurrence state (persists across chunks)
    states_ref: (TT, state)   per-chunk state history scratch
    """
    # Reset the carried state at the start of each batch row's time scan.
    @pl.when(pl.program_id(1) == 0)
    def _():
        s_ref[...] = jnp.zeros_like(s_ref)

    a = a_ref[...]                        # loop-invariant load (hoisted)
    tt = x_ref.shape[0]

    def body(t, s):
        x_t = x_ref[pl.ds(t, 1), :]       # (1, state)
        s = s * a + x_t                   # elementwise recurrence (VPU only)
        states_ref[pl.ds(t, 1), :] = s
        return s

    s_final = lax.fori_loop(0, tt, body, s_ref[...], unroll=8)
    s_ref[...] = s_final

    # One batched output projection + one slab store per chunk.
    y_ref[...] = jnp.dot(
        states_ref[...], c_ref[...], preferred_element_type=jnp.float32
    ).astype(y_ref.dtype)


def ssm_layer_zoh_forward(u, raw_lambda, B_c, C, dt=1.0, time_chunk=256):
    """u: (batch, in_ch, T) float32 -> y: (batch, out_ch, T) float32."""
    batch, in_ch, T = u.shape
    state_dim, out_ch = C.shape

    # --- ZOH discretization (cheap parameter setup, plain JAX) ---
    lam = -jax.nn.softplus(raw_lambda.astype(jnp.float32))        # (state,)
    A_d = jnp.exp(lam * dt)                                       # (state,)
    eps = 1e-6
    safe_lam = jnp.where(jnp.abs(lam) > eps, lam, jnp.ones_like(lam))
    factor = jnp.where(jnp.abs(lam) > eps, (A_d - 1.0) / safe_lam,
                       jnp.full_like(A_d, dt))
    B_d = B_c.astype(jnp.float32) * factor[None, :]               # (in_ch, state)

    # --- Hoisted input projection: one big matmul; fuses the (b,i,t)->(b,t,s)
    #     layout change so no separate transpose pass over u is needed.
    X = jnp.einsum('bit,is->bts', u.astype(jnp.float32), B_d)     # (batch, T, state)

    # --- time chunking ---
    TT = min(time_chunk, T)
    TT = max(8, -(-TT // 8) * 8)          # multiple of 8 (sublane granularity)
    num_chunks = -(-T // TT)
    T_pad = num_chunks * TT
    if T_pad != T:
        # zero-padded trailing steps come after the real data -> they cannot
        # affect the first T outputs; padded outputs are sliced off below.
        X = jnp.pad(X, ((0, 0), (0, T_pad - T), (0, 0)))

    A2 = A_d.reshape(1, state_dim).astype(jnp.float32)
    C32 = C.astype(jnp.float32)

    y = pl.pallas_call(
        _ssm_scan_chunk_kernel,
        out_shape=jax.ShapeDtypeStruct((batch, T_pad, out_ch), jnp.float32),
        grid_spec=pltpu.PrefetchScalarGridSpec(
            num_scalar_prefetch=0,
            grid=(batch, num_chunks),
            in_specs=[
                pl.BlockSpec((None, TT, state_dim), lambda b, c: (b, c, 0)),
                pl.BlockSpec((1, state_dim), lambda b, c: (0, 0)),
                pl.BlockSpec((state_dim, out_ch), lambda b, c: (0, 0)),
            ],
            out_specs=pl.BlockSpec((None, TT, out_ch), lambda b, c: (b, c, 0)),
            scratch_shapes=[
                pltpu.VMEM((1, state_dim), jnp.float32),      # carried state
                pltpu.VMEM((TT, state_dim), jnp.float32),     # chunk state history
            ],
        ),
        compiler_params=pltpu.CompilerParams(
            dimension_semantics=("parallel", "arbitrary")),
    )(X, A2, C32)

    y = y[:, :T, :]
    # Final layout change on the smallest tensor; in a larger model this
    # transpose fuses into whatever consumes y.
    return jnp.transpose(y, (0, 2, 1))                            # (batch, out_ch, T)


def _reference_forward(u, raw_lambda, B_c, C, dt=1.0):
    lam = -jax.nn.softplus(raw_lambda)
    A_d = jnp.exp(lam * dt)
    safe_lam = jnp.where(jnp.abs(lam) > 1e-6, lam, jnp.ones_like(lam))
    factor = jnp.where(jnp.abs(lam) > 1e-6, (A_d - 1.0) / safe_lam,
                       jnp.full_like(A_d, dt))
    B_d = B_c * factor[None, :]
    batch, _, T = u.shape
    s = jnp.zeros((batch, raw_lambda.shape[0]), jnp.float32)
    outs = []
    for t in range(T):
        s = s * A_d[None, :] + u[..., t] @ B_d
        outs.append(s @ C)
    return jnp.stack(outs, axis=-1)


if __name__ == "__main__":
    batch, in_ch, out_ch, state_dim, T = 2, 4, 8, 32, 16
    dt = 1.0

    key = jax.random.PRNGKey(0)
    k_b, k_c, k_u = jax.random.split(key, 3)
    raw_lambda = jnp.zeros((state_dim,), jnp.float32)
    B_c = jax.random.normal(k_b, (in_ch, state_dim), jnp.float32) * (1.0 / in_ch ** 0.5)
    C = jax.random.normal(k_c, (state_dim, out_ch), jnp.float32) * (1.0 / state_dim ** 0.5)
    u = jax.random.normal(k_u, (batch, in_ch, T), jnp.float32)

    # time_chunk=8 so this small demo exercises the multi-chunk path
    # (cross-chunk state carry) and the parallel batch grid axis.
    y = ssm_layer_zoh_forward(u, raw_lambda, B_c, C, dt, time_chunk=8)
    y = jax.block_until_ready(y)

    y_ref = _reference_forward(u, raw_lambda, B_c, C, dt)
    assert y.shape == (batch, out_ch, T)
    assert jnp.allclose(y, y_ref, atol=1e-4, rtol=1e-4)

    print("KERNEL_OK")
</pallas_src>

<mosaic_0001>
module attributes {stable_mosaic.version = 11 : i64} {
  func.func @_ssm_scan_chunk_kernel(%arg0: i32, %arg1: i32, %arg2: memref<1x8x32xf32, #tpu.memory_space<vmem>>, %arg3: memref<1x32xf32, #tpu.memory_space<vmem>>, %arg4: memref<32x8xf32, #tpu.memory_space<vmem>>, %arg5: memref<1x8x8xf32, #tpu.memory_space<vmem>>, %arg6: memref<1x32xf32, #tpu.memory_space<vmem>>, %arg7: memref<8x32xf32, #tpu.memory_space<vmem>>) attributes {dimension_semantics = [#tpu.dimension_semantics<parallel>, #tpu.dimension_semantics<arbitrary>], iteration_bounds = array<i64: 2, 2>, scalar_prefetch = 0 : i64, scratch_operands = 2 : i64, tpu.core_type = #tpu.core_type<tc>, window_params = [{transform_indices = @transform_0, window_bounds = array<i64: 1, 8, 32>}, {pipeline_mode = #tpu.pipeline_mode<synchronous>, transform_indices = @transform_1, window_bounds = array<i64: 1, 32>}, {pipeline_mode = #tpu.pipeline_mode<synchronous>, transform_indices = @transform_2, window_bounds = array<i64: 32, 8>}, {transform_indices = @transform_3, window_bounds = array<i64: 1, 8, 8>}]} {
    %c0_i32 = arith.constant 0 : i32
    %0 = arith.cmpi eq, %arg1, %c0_i32 : i32
    %1 = arith.extui %0 : i1 to i32
    %c0_i32_0 = arith.constant 0 : i32
    %2 = arith.cmpi ne, %1, %c0_i32_0 : i32
    scf.if %2 {
      %cst_38 = arith.constant 0.000000e+00 : f32
      %68 = vector.broadcast %cst_38 : f32 to vector<1x32xf32>
      %c0_39 = arith.constant 0 : index
      %c0_40 = arith.constant 0 : index
      %69 = vector.load %arg6[%c0_39, %c0_40] : memref<1x32xf32, #tpu.memory_space<vmem>>, vector<1x32xf32>
      tpu.vector_store %arg6[%c0_39, %c0_40], %68 {strides = array<i32>} : memref<1x32xf32, #tpu.memory_space<vmem>>, vector<1x32xf32>,
    } else {
    }
    %c0 = arith.constant 0 : index
    %c0_1 = arith.constant 0 : index
    %3 = vector.load %arg3[%c0, %c0_1] : memref<1x32xf32, #tpu.memory_space<vmem>>, vector<1x32xf32>
    %c0_2 = arith.constant 0 : index
    %c0_3 = arith.constant 0 : index
    %4 = vector.load %arg6[%c0_2, %c0_3] : memref<1x32xf32, #tpu.memory_space<vmem>>, vector<1x32xf32>
    %c0_i32_4 = arith.constant 0 : i32
    %c0_5 = arith.constant 0 : index
    %5 = arith.index_cast %c0_i32_4 : i32 to index
    %c0_6 = arith.constant 0 : index
    %6 = vector.load %arg2[%c0_5, %5, %c0_6] : memref<1x8x32xf32, #tpu.memory_space<vmem>>, vector<1x1x32xf32>
    %7 = vector.shape_cast %6 : vector<1x1x32xf32> to vector<1x32xf32>
    %8 = arith.mulf %4, %3 : vector<1x32xf32>
    %9 = arith.addf %8, %7 : vector<1x32xf32>
    %10 = arith.index_cast %c0_i32_4 : i32 to index
    %c0_7 = arith.constant 0 : index
    %11 = vector.load %arg7[%10, %c0_7] : memref<8x32xf32, #tpu.memory_space<vmem>>, vector<1x32xf32>
    tpu.vector_store %arg7[%10, %c0_7], %9 {strides = array<i32>} : memref<8x32xf32, #tpu.memory_space<vmem>>, vector<1x32xf32>,
    %c1_i32 = arith.constant 1 : i32
    %c0_8 = arith.constant 0 : index
    %12 = arith.index_cast %c1_i32 : i32 to index
    %c0_9 = arith.constant 0 : index
    %13 = vector.load %arg2[%c0_8, %12, %c0_9] : memref<1x8x32xf32, #tpu.memory_space<vmem>>, vector<1x1x32xf32>
    %14 = vector.shape_cast %13 : vector<1x1x32xf32> to vector<1x32xf32>
    %15 = arith.mulf %9, %3 : vector<1x32xf32>
    %16 = arith.addf %15, %14 : vector<1x32xf32>
    %17 = arith.index_cast %c1_i32 : i32 to index
    %c0_10 = arith.constant 0 : index
    %18 = vector.load %arg7[%17, %c0_10] : memref<8x32xf32, #tpu.memory_space<vmem>>, vector<1x32xf32>
    tpu.vector_store %arg7[%17, %c0_10], %16 {strides = array<i32>} : memref<8x32xf32, #tpu.memory_space<vmem>>, vector<1x32xf32>,
    %c2_i32 = arith.constant 2 : i32
    %c0_11 = arith.constant 0 : index
    %19 = arith.index_cast %c2_i32 : i32 to index
    %c0_12 = arith.constant 0 : index
    %20 = vector.load %arg2[%c0_11, %19, %c0_12] : memref<1x8x32xf32, #tpu.memory_space<vmem>>, vector<1x1x32xf32>
    %21 = vector.shape_cast %20 : vector<1x1x32xf32> to vector<1x32xf32>
    %22 = arith.mulf %16, %3 : vector<1x32xf32>
    %23 = arith.addf %22, %21 : vector<1x32xf32>
    %24 = arith.index_cast %c2_i32 : i32 to index
    %c0_13 = arith.constant 0 : index
    %25 = vector.load %arg7[%24, %c0_13] : memref<8x32xf32, #tpu.memory_space<vmem>>, vector<1x32xf32>
    tpu.vector_store %arg7[%24, %c0_13], %23 {strides = array<i32>} : memref<8x32xf32, #tpu.memory_space<vmem>>, vector<1x32xf32>,
    %c3_i32 = arith.constant 3 : i32
    %c0_14 = arith.constant 0 : index
    %26 = arith.index_cast %c3_i32 : i32 to index
    %c0_15 = arith.constant 0 : index
    %27 = vector.load %arg2[%c0_14, %26, %c0_15] : memref<1x8x32xf32, #tpu.memory_space<vmem>>, vector<1x1x32xf32>
    %28 = vector.shape_cast %27 : vector<1x1x32xf32> to vector<1x32xf32>
    %29 = arith.mulf %23, %3 : vector<1x32xf32>
    %30 = arith.addf %29, %28 : vector<1x32xf32>
    %31 = arith.index_cast %c3_i32 : i32 to index
    %c0_16 = arith.constant 0 : index
    %32 = vector.load %arg7[%31, %c0_16] : memref<8x32xf32, #tpu.memory_space<vmem>>, vector<1x32xf32>
    tpu.vector_store %arg7[%31, %c0_16], %30 {strides = array<i32>} : memref<8x32xf32, #tpu.memory_space<vmem>>, vector<1x32xf32>,
    %c4_i32 = arith.constant 4 : i32
    %c0_17 = arith.constant 0 : index
    %33 = arith.index_cast %c4_i32 : i32 to index
    %c0_18 = arith.constant 0 : index
    %34 = vector.load %arg2[%c0_17, %33, %c0_18] : memref<1x8x32xf32, #tpu.memory_space<vmem>>, vector<1x1x32xf32>
    %35 = vector.shape_cast %34 : vector<1x1x32xf32> to vector<1x32xf32>
    %36 = arith.mulf %30, %3 : vector<1x32xf32>
    %37 = arith.addf %36, %35 : vector<1x32xf32>
    %38 = arith.index_cast %c4_i32 : i32 to index
    %c0_19 = arith.constant 0 : index
    %39 = vector.load %arg7[%38, %c0_19] : memref<8x32xf32, #tpu.memory_space<vmem>>, vector<1x32xf32>
    tpu.vector_store %arg7[%38, %c0_19], %37 {strides = array<i32>} : memref<8x32xf32, #tpu.memory_space<vmem>>, vector<1x32xf32>,
    %c5_i32 = arith.constant 5 : i32
    %c0_20 = arith.constant 0 : index
    %40 = arith.index_cast %c5_i32 : i32 to index
    %c0_21 = arith.constant 0 : index
    %41 = vector.load %arg2[%c0_20, %40, %c0_21] : memref<1x8x32xf32, #tpu.memory_space<vmem>>, vector<1x1x32xf32>
    %42 = vector.shape_cast %41 : vector<1x1x32xf32> to vector<1x32xf32>
    %43 = arith.mulf %37, %3 : vector<1x32xf32>
    %44 = arith.addf %43, %42 : vector<1x32xf32>
    %45 = arith.index_cast %c5_i32 : i32 to index
    %c0_22 = arith.constant 0 : index
    %46 = vector.load %arg7[%45, %c0_22] : memref<8x32xf32, #tpu.memory_space<vmem>>, vector<1x32xf32>
    tpu.vector_store %arg7[%45, %c0_22], %44 {strides = array<i32>} : memref<8x32xf32, #tpu.memory_space<vmem>>, vector<1x32xf32>,
    %c6_i32 = arith.constant 6 : i32
    %c0_23 = arith.constant 0 : index
    %47 = arith.index_cast %c6_i32 : i32 to index
    %c0_24 = arith.constant 0 : index
    %48 = vector.load %arg2[%c0_23, %47, %c0_24] : memref<1x8x32xf32, #tpu.memory_space<vmem>>, vector<1x1x32xf32>
    %49 = vector.shape_cast %48 : vector<1x1x32xf32> to vector<1x32xf32>
    %50 = arith.mulf %44, %3 : vector<1x32xf32>
    %51 = arith.addf %50, %49 : vector<1x32xf32>
    %52 = arith.index_cast %c6_i32 : i32 to index
    %c0_25 = arith.constant 0 : index
    %53 = vector.load %arg7[%52, %c0_25] : memref<8x32xf32, #tpu.memory_space<vmem>>, vector<1x32xf32>
    tpu.vector_store %arg7[%52, %c0_25], %51 {strides = array<i32>} : memref<8x32xf32, #tpu.memory_space<vmem>>, vector<1x32xf32>,
    %c7_i32 = arith.constant 7 : i32
    %c0_26 = arith.constant 0 : index
    %54 = arith.index_cast %c7_i32 : i32 to index
    %c0_27 = arith.constant 0 : index
    %55 = vector.load %arg2[%c0_26, %54, %c0_27] : memref<1x8x32xf32, #tpu.memory_space<vmem>>, vector<1x1x32xf32>
    %56 = vector.shape_cast %55 : vector<1x1x32xf32> to vector<1x32xf32>
    %57 = arith.mulf %51, %3 : vector<1x32xf32>
    %58 = arith.addf %57, %56 : vector<1x32xf32>
    %59 = arith.index_cast %c7_i32 : i32 to index
    %c0_28 = arith.constant 0 : index
    %60 = vector.load %arg7[%59, %c0_28] : memref<8x32xf32, #tpu.memory_space<vmem>>, vector<1x32xf32>
    tpu.vector_store %arg7[%59, %c0_28], %58 {strides = array<i32>} : memref<8x32xf32, #tpu.memory_space<vmem>>, vector<1x32xf32>,
    %c8_i32 = arith.constant 8 : i32
    %c0_29 = arith.constant 0 : index
    %c0_30 = arith.constant 0 : index
    %61 = vector.load %arg6[%c0_29, %c0_30] : memref<1x32xf32, #tpu.memory_space<vmem>>, vector<1x32xf32>
    tpu.vector_store %arg6[%c0_29, %c0_30], %58 {strides = array<i32>} : memref<1x32xf32, #tpu.memory_space<vmem>>, vector<1x32xf32>,
    %c0_31 = arith.constant 0 : index
    %c0_32 = arith.constant 0 : index
    %62 = vector.load %arg7[%c0_31, %c0_32] : memref<8x32xf32, #tpu.memory_space<vmem>>, vector<8x32xf32>
    %c0_33 = arith.constant 0 : index
    %c0_34 = arith.constant 0 : index
    %63 = vector.load %arg4[%c0_33, %c0_34] : memref<32x8xf32, #tpu.memory_space<vmem>>, vector<32x8xf32>
    %cst = arith.constant dense<0.000000e+00> : vector<8x8xf32>
    %64 = tpu.matmul %62, %63, %cst {dimension_numbers = #tpu.dot_dimension_numbers<[1], [0], [0], [1], [0, 0, 1, 1], [], []>} : vector<8x32xf32>, vector<32x8xf32>, vector<8x8xf32> -> vector<8x8xf32>
    %c0_35 = arith.constant 0 : index
    %c0_36 = arith.constant 0 : index
    %c0_37 = arith.constant 0 : index
    %65 = vector.load %arg5[%c0_35, %c0_36, %c0_37] : memref<1x8x8xf32, #tpu.memory_space<vmem>>, vector<1x8x8xf32>
    %66 = vector.shape_cast %65 : vector<1x8x8xf32> to vector<8x8xf32>
    %67 = vector.shape_cast %64 : vector<8x8xf32> to vector<1x8x8xf32>
    tpu.vector_store %arg5[%c0_35, %c0_36, %c0_37], %67 {strides = array<i32>} : memref<1x8x8xf32, #tpu.memory_space<vmem>>, vector<1x8x8xf32>,
    return
  }
  func.func @transform_0(%arg0: i32, %arg1: i32) -> (i32, i32, i32) {
    %c0_i32 = arith.constant 0 : i32
    %c0_i32_0 = arith.constant 0 : i32
    return %arg0, %arg1, %c0_i32 : i32, i32, i32
  }
  func.func @transform_1(%arg0: i32, %arg1: i32) -> (i32, i32) {
    %c0_i32 = arith.constant 0 : i32
    %c0_i32_0 = arith.constant 0 : i32
    %c0_i32_1 = arith.constant 0 : i32
    return %c0_i32, %c0_i32_0 : i32, i32
  }
  func.func @transform_2(%arg0: i32, %arg1: i32) -> (i32, i32) {
    %c0_i32 = arith.constant 0 : i32
    %c0_i32_0 = arith.constant 0 : i32
    %c0_i32_1 = arith.constant 0 : i32
    return %c0_i32, %c0_i32_0 : i32, i32
  }
  func.func @transform_3(%arg0: i32, %arg1: i32) -> (i32, i32, i32) {
    %c0_i32 = arith.constant 0 : i32
    %c0_i32_0 = arith.constant 0 : i32
    return %arg0, %arg1, %c0_i32 : i32, i32, i32
  }
}

</mosaic_0001>

<llo_original>
// kernel: tpu_custom_call.1
$region0: #{tpu_custom_call.1}
  #allocation0 [shape = 'u32[]', space=smem, size = 0x4, offset = 0x4, fixed_abs, tag = 'smem constant byte address 0x4 - core index']
  #allocation1 [shape = 'u32[144,128]{1,0:T(1,128)}', space=vmem, size = 0x12000, scoped, tag = 'internal scratch']
  #allocation2 [shape = 'f32[1,32]{1,0:T(1,128)}', space=vmem, size = 0x200, scoped, tag = 'scratch operand']
  #allocation3 [shape = 'f32[8,32]{1,0:T(8,128)}', space=vmem, size = 0x1000, scoped, tag = 'scratch operand']
  %s0 = inlined_call_operand.vmem [shape: f32[2,16,32], index: 0, kind: input, shape index: {}]
  %s1 = inlined_call_operand.vmem [shape: f32[1,32], index: 1, kind: input, shape index: {}]
  %s2 = inlined_call_operand.vmem [shape: f32[32,8], index: 2, kind: input, shape index: {}]
  %s3 = inlined_call_operand.vmem [shape: f32[2,16,8], index: 3, kind: output, shape index: {}]
  %s4 = sld [smem:[#allocation0]]
  $region49: #{tpu_custom_call.1} parent=0
    _
  %s6 = ssub.s32 1, %s4
  %s7 = scalar_select 0, %s6, %s4
  loop: start=0, step=1, limit=6
  $region2: #{tpu_custom_call.1} parent=0 // loop_pre_header
    _
  $region3: #{tpu_custom_call.1} parent=0 // loop_header
    %s9 = sphi 0, %s13
    %p10 = scmp.ge.s32.totalorder %s9, 6
    %s16 = sphi 0, %s28
    %s17 = sphi 0, %s24
    %s18 = sphi 0, %s16
    %s19 = sphi 0, %s17
    %s20 = sphi 0, %s18
    %s21 = sphi 0, %s19
    %s33 = sphi 0, %s35
    %s36 = sphi 0, %s33
    %s37 = sphi 0, %s36
    %s53 = sphi 0, %s37
    %s57 = sphi 0, %s57
    %s59 = sphi 0, %s57
    %s60 = sphi 0, %s59
    %s74 = sphi 0, %s60
    %s78 = sphi 0, %s78
    %s80 = sphi 0, %s78
    %s81 = sphi 0, %s80
    %s95 = sphi 0, %s81
    %s103 = sphi 0, %s105
    %s106 = sphi 0, %s103
    %s107 = sphi 0, %s106
    %s123 = sphi 0, %s107
  $region4: #{tpu_custom_call.1} parent=0 // loop_header_branch
    %12 = sbr.rel (%p10) target = $region8
  $region5: #{tpu_custom_call.1} parent=0 // loop_body
    %s14 = ssub.s32 %s9, 1
    %s15 = ssub.s32 %s9, 2
    %s22 = sadd.s32 1, %s17
    %p23 = scmp.ge.s32.totalorder %s22, 2
    %s24 = scalar_select %p23, 0, %s22
    %s25 = sadd.s32 1, %s16
    %s26 = scalar_select %p23, %s25, %s16
    %p27 = scmp.ge.s32.totalorder %s26, 2
    %s28 = scalar_select %p27, 0, %s26
    %s29 = ssub.s32 %s16, %s28
    %s30 = ssub.s32 %s17, %s24
    %s31 = sor.u32 %s29, %s30
    %p32 = scmp.eq.s32.totalorder %s31, 0
    %s34 = sadd.s32 %s33, 1
    %s35 = scalar_select %p32, %s33, %s34
    %p38 = pneg %p32
    %p39 = scmp.eq.s32.totalorder %s9, 3
    %p40 = por %p38, %p39
    %p41 = scmp.ne.s32.totalorder %s33, %s36
    %p42 = scmp.eq.s32.totalorder %s9, 0
    %p43 = por %p41, %p42
    %p44 = scmp.ne.s32.totalorder %s33, %s36
    %p45 = scmp.eq.s32.totalorder %s14, 3
    %p46 = por %p44, %p45
    %p47 = scmp.ne.s32.totalorder %s36, %s37
    %p48 = scmp.eq.s32.totalorder %s14, 0
    %p49 = por %p47, %p48
    %p50 = scmp.ne.s32.totalorder %s36, %s37
    %p51 = scmp.eq.s32.totalorder %s15, 3
    %p52 = por %p50, %p51
    %p54 = scmp.ne.s32.totalorder %s37, %s53
    %p55 = scmp.eq.s32.totalorder %s15, 0
    %p56 = por %p54, %p55
    %s58 = sadd.s32 %s57, 1
    %p61 = scmp.eq.s32.totalorder %s9, 3
    %p62 = scmp.ne.s32.totalorder %s57, %s59
    %p63 = scmp.eq.s32.totalorder %s9, 0
    %p64 = por %p62, %p63
    %p65 = scmp.ne.s32.totalorder %s57, %s59
    %p66 = scmp.eq.s32.totalorder %s14, 3
    %p67 = por %p65, %p66
    %p68 = scmp.ne.s32.totalorder %s59, %s60
    %p69 = scmp.eq.s32.totalorder %s14, 0
    %p70 = por %p68, %p69
    %p71 = scmp.ne.s32.totalorder %s59, %s60
    %p72 = scmp.eq.s32.totalorder %s15, 3
    %p73 = por %p71, %p72
    %p75 = scmp.ne.s32.totalorder %s60, %s74
    %p76 = scmp.eq.s32.totalorder %s15, 0
    %p77 = por %p75, %p76
    %s79 = sadd.s32 %s78, 1
    %p82 = scmp.eq.s32.totalorder %s9, 3
    %p83 = scmp.ne.s32.totalorder %s78, %s80
    %p84 = scmp.eq.s32.totalorder %s9, 0
    %p85 = por %p83, %p84
    %p86 = scmp.ne.s32.totalorder %s78, %s80
    %p87 = scmp.eq.s32.totalorder %s14, 3
    %p88 = por %p86, %p87
    %p89 = scmp.ne.s32.totalorder %s80, %s81
    %p90 = scmp.eq.s32.totalorder %s14, 0
    %p91 = por %p89, %p90
    %p92 = scmp.ne.s32.totalorder %s80, %s81
    %p93 = scmp.eq.s32.totalorder %s15, 3
    %p94 = por %p92, %p93
    %p96 = scmp.ne.s32.totalorder %s81, %s95
    %p97 = scmp.eq.s32.totalorder %s15, 0
    %p98 = por %p96, %p97
    %s99 = ssub.s32 %s16, %s28
    %s100 = ssub.s32 %s17, %s24
    %s101 = sor.u32 %s99, %s100
    %p102 = scmp.eq.s32.totalorder %s101, 0
    %s104 = sadd.s32 %s103, 1
    %s105 = scalar_select %p102, %s103, %s104
    %p108 = pneg %p102
    %p109 = scmp.eq.s32.totalorder %s9, 3
    %p110 = por %p108, %p109
    %p111 = scmp.ne.s32.totalorder %s103, %s106
    %p112 = scmp.eq.s32.totalorder %s9, 0
    %p113 = por %p111, %p112
    %p114 = scmp.ne.s32.totalorder %s103, %s106
    %p115 = scmp.eq.s32.totalorder %s14, 3
    %p116 = por %p114, %p115
    %p117 = scmp.ne.s32.totalorder %s106, %s107
    %p118 = scmp.eq.s32.totalorder %s14, 0
    %p119 = por %p117, %p118
    %p120 = scmp.ne.s32.totalorder %s106, %s107
    %p121 = scmp.eq.s32.totalorder %s15, 3
    %p122 = por %p120, %p121
    %p124 = scmp.ne.s32.totalorder %s107, %s123
    %p125 = scmp.eq.s32.totalorder %s15, 0
    %p126 = por %p124, %p125
    %p127 = scmp.le.s32.totalorder 1, %s9
    %p128 = scmp.lt.s32.totalorder %s9, 5
    %p129 = pnand %p127, %p128
    %p130 = pneg %p129
    // Predicated region
    $region9: #{tpu_custom_call.1} parent=5 // pred_check
      _
    $region10: #{tpu_custom_call.1} parent=5 // pred_check_branch
      %132 = sbr.rel (%p129) target = $region12
    $region11: #{tpu_custom_call.1} parent=5 // pred_region
      %s133 = ssub.s32 %s9, 1
      // Predicated region
      $region13: #{tpu_custom_call.1} parent=11 // pred_check
        %p134 = pneg %p70
      $region14: #{tpu_custom_call.1} parent=11 // pred_check_branch
        %136 = sbr.rel (%p134) target = $region16
      $region15: #{tpu_custom_call.1} parent=11 // pred_region
        _
      $region16: #{tpu_custom_call.1} parent=11 // pred_fallthru
        _
      // Predicated region
      $region17: #{tpu_custom_call.1} parent=11 // pred_check
        %p137 = pneg %p91
      $region18: #{tpu_custom_call.1} parent=11 // pred_check_branch
        %139 = sbr.rel (%p137) target = $region20
      $region19: #{tpu_custom_call.1} parent=11 // pred_region
        _
      $region20: #{tpu_custom_call.1} parent=11 // pred_fallthru
        _
    $region12: #{tpu_custom_call.1} parent=5 // pred_fallthru
      _
    %p140 = scmp.lt.s32.totalorder %s9, 4
    // Predicated region
    $region21: #{tpu_custom_call.1} parent=5 // pred_check
      %p141 = pneg %p140
    $region22: #{tpu_custom_call.1} parent=5 // pred_check_branch
      %143 = sbr.rel (%p141) target = $region24
    $region23: #{tpu_custom_call.1} parent=5 // pred_region
      // Predicated region
      $region25: #{tpu_custom_call.1} parent=23 // pred_check
        %p144 = pneg %p43
      $region26: #{tpu_custom_call.1} parent=23 // pred_check_branch
        %146 = sbr.rel (%p144) target = $region28
      $region27: #{tpu_custom_call.1} parent=23 // pred_region
        %p147 = scmp.lt.s32.totalorder %s16, 1
        %s148 = scalar_select %p147, %s16, 1
        %p149 = scmp.lt.s32.totalorder %s17, 1
        %s150 = scalar_select %p149, %s17, 1
        %s151 = smul.addr %s148, 2
        %s152 = sadd.s32 %s150, %s151
        %s153 = smul.addr %s152, 8
        %s154 = scalar_lea.vmem %s0, %s153
      $region28: #{tpu_custom_call.1} parent=23 // pred_fallthru
        _
    $region24: #{tpu_custom_call.1} parent=5 // pred_fallthru
      _
    %p155 = scmp.le.s32.totalorder 1, %s9
    %p156 = scmp.lt.s32.totalorder %s9, 5
    %p157 = pnand %p155, %p156
    %p158 = pneg %p157
    // Predicated region
    $region29: #{tpu_custom_call.1} parent=5 // pred_check
      _
    $region30: #{tpu_custom_call.1} parent=5 // pred_check_branch
      %160 = sbr.rel (%p157) target = $region32
    $region31: #{tpu_custom_call.1} parent=5 // pred_region
      %s161 = ssub.s32 %s9, 1
      %p162 = scmp.lt.s32.totalorder %s18, 1
      %s163 = scalar_select %p162, %s18, 1
      %p164 = scmp.lt.s32.totalorder %s19, 1
      %s165 = scalar_select %p164, %s19, 1
      %s166 = smul.addr %s163, 2
      %s167 = sadd.s32 %s165, %s166
      %s168 = smul.addr %s167, 8
      %s169 = scalar_lea.vmem %s0, %s168
      %p170 = pneg %p49
      %p171 = pneg %p46
      %p172 = pneg %p70
      %p173 = pneg %p67
      %p174 = pneg %p91
      %p175 = pneg %p88
      %p176 = pneg %p119
      %p177 = pneg %p116
      %p178 = scmp.lt.s32.totalorder %s18, 1
      %s179 = scalar_select %p178, %s18, 1
      %p180 = scmp.lt.s32.totalorder %s19, 1
      %s181 = scalar_select %p180, %s19, 1
      %s182 = smul.addr %s179, 2
      %s183 = sadd.s32 %s181, %s182
      %s184 = smul.addr %s183, 8
      %s185 = scalar_lea.vmem %s3, %s184
      %p186 = scmp.lt.s32.totalorder %s18, 1
      %s187 = scalar_select %p186, %s18, 1
      %p188 = scmp.lt.s32.totalorder %s19, 1
      %s189 = scalar_select %p188, %s19, 1
      %s190 = smul.addr %s187, 2
      %s191 = sadd.s32 %s189, %s190
      %s192 = smul.addr %s191, 8
      %s193 = scalar_lea.vmem %s0, %s192
      %p194 = scmp.lt.s32.totalorder %s18, 1
      %s195 = scalar_select %p194, %s18, 1
      %p196 = scmp.lt.s32.totalorder %s19, 1
      %s197 = scalar_select %p196, %s19, 1
      %s198 = smul.addr %s195, 2
      %s199 = sadd.s32 %s197, %s198
      %s200 = smul.addr %s199, 8
      %s201 = scalar_lea.vmem %s3, %s200
      %p202 = scmp.eq.s32.totalorder %s19, 0
      // Predicated region
      $region33: #{tpu_custom_call.1} parent=31 // pred_check
        %p203 = pneg %p202
      $region34: #{tpu_custom_call.1} parent=31 // pred_check_branch
        %205 = sbr.rel (%p203) target = $region36
      $region35: #{tpu_custom_call.1} parent=31 // pred_region
        %vm206 = vcmask 253952
        %207 = vst.msk [vmem:[#allocation2] sm:$0x1] %vm206, 0.0
      $region36: #{tpu_custom_call.1} parent=31 // pred_fallthru
        _
      %v208 = vld [vmem:[%s1] sm:$0x1]
      %v209 = vld [vmem:[#allocation2] sm:$0x1]
      %v210 = vld [vmem:[%s193] sm:$0x1]
      %v211 = vmul.f32 %v209, %v208
      %v212 = vadd.f32 %v211, %v210
      %vm213 = vcmask 253952
      %214 = vst.msk [vmem:[#allocation3] sm:$0x1] %vm213, %v212
      %v215 = vld [vmem:[%s193 + $0x1] sm:$0x1]
      %v216 = vmul.f32 %v212, %v208
      %v217 = vadd.f32 %v216, %v215
      %218 = vst.msk [vmem:[#allocation3 + $0x1] sm:$0x1] %vm213, %v217
      %v219 = vld [vmem:[%s193 + $0x2] sm:$0x1]
      %v220 = vmul.f32 %v217, %v208
      %v221 = vadd.f32 %v220, %v219
      %222 = vst.msk [vmem:[#allocation3 + $0x2] sm:$0x1] %vm213, %v221
      %v223 = vld [vmem:[%s193 + $0x3] sm:$0x1]
      %v224 = vmul.f32 %v221, %v208
      %v225 = vadd.f32 %v224, %v223
      %226 = vst.msk [vmem:[#allocation3 + $0x3] sm:$0x1] %vm213, %v225
      %v227 = vld [vmem:[%s193 + $0x4] sm:$0x1]
      %v228 = vmul.f32 %v225, %v208
      %v229 = vadd.f32 %v228, %v227
      %230 = vst.msk [vmem:[#allocation3 + $0x4] sm:$0x1] %vm213, %v229
      %v231 = vld [vmem:[%s193 + $0x5] sm:$0x1]
      %v232 = vmul.f32 %v229, %v208
      %v233 = vadd.f32 %v232, %v231
      %234 = vst.msk [vmem:[#allocation3 + $0x5] sm:$0x1] %vm213, %v233
      %v235 = vld [vmem:[%s193 + $0x6] sm:$0x1]
      %v236 = vmul.f32 %v233, %v208
      %v237 = vadd.f32 %v236, %v235
      %238 = vst.msk [vmem:[#allocation3 + $0x6] sm:$0x1] %vm213, %v237
      %v239 = vld [vmem:[%s193 + $0x7] sm:$0x1]
      %v240 = vmul.f32 %v237, %v208
      %v241 = vadd.f32 %v240, %v239
      %242 = vst.msk [vmem:[#allocation3 + $0x7] sm:$0x1] %vm213, %v241
      %243 = vst.msk [vmem:[#allocation2] sm:$0x1] %vm213, %v241
      %v244 = vld [vmem:[#allocation3] sm:$0xff]
      %v245 = vld [vmem:[%s2] sm:$0xff]
      %v246 = vld [vmem:[%s2 + $0x8] sm:$0xff]
      %v247 = vld [vmem:[%s2 + $0x10] sm:$0xff]
      %v248 = vld [vmem:[%s2 + $0x18] sm:$0xff]
      %vm249 = vcmask 261120
      %v251 = vsel %vm249, %v244, 0
      %253 = vmatprep.subr.mxu0 0.0
      %254 = vmatpush1.msra.mxu0 0.0
      %255 = vmatprep.subr.mxu0 0.0
      %256 = vmatpush1.msra.mxu0 0.0
      %257 = vmatprep.subr.mxu0 0.0
      %258 = vmatpush1.msra.mxu0 0.0
      %259 = vmatprep.subr.mxu0 0.0
      %260 = vmatpush1.msra.mxu0 0.0
      %261 = vmatprep.subr.mxu0 0.0
      %262 = vmatpush1.msra.mxu0 0.0
      %263 = vmatprep.subr.mxu0 0.0
      %264 = vmatpush1.msra.mxu0 0.0
      %265 = vmatprep.subr.mxu0 0.0
      %266 = vmatpush1.msra.mxu0 0.0
      %267 = vmatprep.subr.mxu0 0.0
      %268 = vmatpush1.msra.mxu0 0.0
      %269 = vmatprep.subr.mxu0 0.0
      %270 = vmatpush1.msra.mxu0 0.0
      %271 = vmatprep.subr.mxu0 0.0
      %272 = vmatpush1.msra.mxu0 0.0
      %273 = vmatprep.subr.mxu0 0.0
      %274 = vmatpush1.msra.mxu0 0.0
      %275 = vmatprep.subr.mxu0 0.0
      %276 = vmatpush1.msra.mxu0 0.0
      %277 = vmatprep.subr.mxu0 0.0
      %278 = vmatpush1.msra.mxu0 %v248
      %279 = vmatprep.subr.mxu0 0.0
      %280 = vmatpush1.msra.mxu0 %v247
      %281 = vmatprep.subr.mxu0 0.0
      %282 = vmatpush1.msra.mxu0 %v246
      %283 = vmatprep.subr.mxu0 0.0
      %284 = vmatpush1.msra.mxu0 %v245
      %285 = vmatprep.subr.mxu0 0.0
      %286 = vmatpush2.msra.mxu0 0.0
      %287 = vmatprep.subr.mxu0 0.0
      %288 = vmatpush2.msra.mxu0 0.0
      %289 = vmatprep.subr.mxu0 0.0
      %290 = vmatpush2.msra.mxu0 0.0
      %291 = vmatprep.subr.mxu0 0.0
      %292 = vmatpush2.msra.mxu0 0.0
      %293 = vmatprep.subr.mxu0 0.0
      %294 = vmatpush2.msra.mxu0 0.0
      %295 = vmatprep.subr.mxu0 0.0
      %296 = vmatpush2.msra.mxu0 0.0
      %297 = vmatprep.subr.mxu0 0.0
      %298 = vmatpush2.msra.mxu0 0.0
      %299 = vmatprep.subr.mxu0 0.0
      %300 = vmatpush2.msra.mxu0 0.0
      %301 = vmatprep.subr.mxu0 0.0
      %302 = vmatpush2.msra.mxu0 0.0
      %303 = vmatprep.subr.mxu0 0.0
      %304 = vmatpush2.msra.mxu0 0.0
      %305 = vmatprep.subr.mxu0 0.0
      %306 = vmatpush2.msra.mxu0 0.0
      %307 = vmatprep.subr.mxu0 0.0
      %308 = vmatpush2.msra.mxu0 0.0
      %309 = vmatprep.subr.mxu0 0.0
      %310 = vmatpush2.msra.mxu0 0.0
      %311 = vmatprep.subr.mxu0 0.0
      %312 = vmatpush2.msra.mxu0 0.0
      %313 = vmatprep.subr.mxu0 0.0
      %314 = vmatpush2.msra.mxu0 0.0
      %315 = vmatprep.subr.mxu0 0.0
      %316 = vmatpush2.msra.mxu0 0.0
      %317 = vmatprep.mubr.f32.mxu0 0.0
      %318 = vmatmul.mubr.f32.gmra.mxu0 %v251
      %v319 = vpop.f32.mrf.mxu0
      %v320 = vadd.f32 0.0, %v319
      %v321 = vpop.f32.mrf.mxu0
      %322 = vdwg.mxu0
      %vm323 = vcmask 64512
      %324 = vst.msk [vmem:[%s201] sm:$0xff] %vm323, %v320
      %p325 = scmp.lt.s32.totalorder %s18, 1
      %s326 = scalar_select %p325, %s18, 1
      %p327 = scmp.lt.s32.totalorder %s19, 1
      %s328 = scalar_select %p327, %s19, 1
      %s329 = smul.addr %s326, 2
      %s330 = sadd.s32 %s328, %s329
      %s331 = smul.addr %s330, 8
      %s332 = scalar_lea.vmem %s3, %s331
      // Predicated region
      $region37: #{tpu_custom_call.1} parent=31 // pred_check
        %p333 = pneg %p116
      $region38: #{tpu_custom_call.1} parent=31 // pred_check_branch
        %335 = sbr.rel (%p333) target = $region40
      $region39: #{tpu_custom_call.1} parent=31 // pred_region
        _
      $region40: #{tpu_custom_call.1} parent=31 // pred_fallthru
        _
    $region32: #{tpu_custom_call.1} parent=5 // pred_fallthru
      _
    %p336 = scmp.le.s32.totalorder 2, %s9
    // Predicated region
    $region41: #{tpu_custom_call.1} parent=5 // pred_check
      %p337 = pneg %p336
    $region42: #{tpu_custom_call.1} parent=5 // pred_check_branch
      %339 = sbr.rel (%p337) target = $region44
    $region43: #{tpu_custom_call.1} parent=5 // pred_region
      %s340 = ssub.s32 %s9, 2
      // Predicated region
      $region45: #{tpu_custom_call.1} parent=43 // pred_check
        %p341 = pneg %p122
      $region46: #{tpu_custom_call.1} parent=43 // pred_check_branch
        %343 = sbr.rel (%p341) target = $region48
      $region47: #{tpu_custom_call.1} parent=43 // pred_region
        %p344 = scmp.lt.s32.totalorder %s20, 1
        %s345 = scalar_select %p344, %s20, 1
        %p346 = scmp.lt.s32.totalorder %s21, 1
        %s347 = scalar_select %p346, %s21, 1
        %s348 = smul.addr %s345, 2
        %s349 = sadd.s32 %s347, %s348
        %s350 = smul.addr %s349, 8
        %s351 = scalar_lea.vmem %s3, %s350
      $region48: #{tpu_custom_call.1} parent=43 // pred_fallthru
        _
    $region44: #{tpu_custom_call.1} parent=5 // pred_fallthru
      _
  $region6: #{tpu_custom_call.1} parent=0 // loop_footer
    %s13 = sadd.s32 1, %s9
  $region7: #{tpu_custom_call.1} parent=0 // loop_footer_branch
    %8 = sbr.rel target = $region3
  $region8: #{tpu_custom_call.1} parent=0 // loop_exit
    _

</llo_original>
